<compile_context>
chip_gen: v5e
topology: v5e:2x2
jax: 0.10.0
libtpu: 0.0.40
codegen_flags: <defaults>
</compile_context>

<pallas_src>
import math

import numpy as np
import jax
import jax.numpy as jnp
from jax.experimental import pallas as pl
from jax.experimental.pallas import tpu as pltpu


def _pe_add_kernel(x_ref, pe_ref, o_ref):
    # x_ref: (tb, C) or (tb, T, F); pe_ref: (1, C) or (1, T, F).
    # Broadcast add over the leading axis -> pure VPU work under the DMAs.
    o_ref[...] = x_ref[...] + pe_ref[...]


def build_temporal_pe(max_len: int, d_model: int) -> jnp.ndarray:
    """Replicates the (non-standard) PE table of the PyTorch module exactly."""
    assert d_model % 2 == 0, "TemporalPositionalEncoding requires even d_model"
    pe = np.zeros((max_len, d_model), dtype=np.float32)
    for pos in range(max_len):
        for i in range(0, d_model, 2):
            pe[pos, i] = math.sin(pos / 10000 ** (2 * i / d_model))
            pe[pos, i + 1] = math.cos(pos / 10000 ** (2 * (i + 1) / d_model))
    return jnp.asarray(pe)


def _choose_block_rows(R: int, row_bytes: int) -> int:
    """Pick the leading block size (rows per grid step)."""
    # ~3 MiB per buffer: 2 (x) + 2 (out) double buffers stay well under v5e's
    # 16 MiB scoped-VMEM default and v7x's 64 MiB physical VMEM.
    budget = 3 * 1024 * 1024
    max_rows = max(8, (budget // max(row_bytes, 1)) // 8 * 8)
    if R <= 8:
        return R  # single block equal to the full dim (allowed by the tiling rule)
    # Force >= 2 grid steps so both v7x TensorCores get work on small inputs.
    half = ((pl.cdiv(R, 2) + 7) // 8) * 8
    tb = min(max_rows, half, R)
    return max(8, tb)


def temporal_positional_encoding(x, pe, lookup_index=None, *, force_pallas=False):
    """
    x:  (B, N, T, F) float32
    pe: (max_len, F) float32  (precomputed table matching the torch buffer)
    returns (B, N, T, F) float32
    """
    B, N, T, F = x.shape
    if lookup_index is not None:
        idx = jnp.asarray(lookup_index)
        assert idx.shape == (T,), (
            f"lookup_index must have length T={T}, got shape {idx.shape}")
        pe_sel = pe[idx]                               # (T, F)
    else:
        pe_sel = pe[:T]                                # (T, F)

    # Tiny inputs: the pallas_call + DMA prologue overhead dominates and the
    # standalone call is a fusion barrier -- let XLA fuse a plain add instead.
    if not force_pallas and x.size * x.dtype.itemsize < (1 << 20):
        return x + pe_sel[None, None, :, :]

    R = B * N
    C = T * F

    if C % 128 == 0:
        # Lane-dense 2-D flatten: unmasked full-lane stores.
        x_in = x.reshape(R, C)
        pe_in = pe_sel.reshape(1, C)
        row_bytes = C * x.dtype.itemsize
        tb = _choose_block_rows(R, row_bytes)
        in_specs = [
            pl.BlockSpec((tb, C), lambda i: (i, 0)),
            pl.BlockSpec((1, C), lambda i: (0, 0)),     # resident in VMEM
        ]
        out_spec = pl.BlockSpec((tb, C), lambda i: (i, 0))
        out_shape = jax.ShapeDtypeStruct((R, C), x.dtype)
    else:
        # Keep T and F as full trailing dims (always satisfies the (8,128)
        # tiling rule).  Unmasked stores iff F % 128 == 0; otherwise we accept
        # the documented masked-store penalty for odd shapes.
        x_in = x.reshape(R, T, F)
        pe_in = pe_sel.reshape(1, T, F)
        row_bytes = T * F * x.dtype.itemsize
        tb = _choose_block_rows(R, row_bytes)
        in_specs = [
            pl.BlockSpec((tb, T, F), lambda i: (i, 0, 0)),
            pl.BlockSpec((1, T, F), lambda i: (0, 0, 0)),
        ]
        out_spec = pl.BlockSpec((tb, T, F), lambda i: (i, 0, 0))
        out_shape = jax.ShapeDtypeStruct((R, T, F), x.dtype)

    grid = (pl.cdiv(R, tb),)

    out = pl.pallas_call(
        _pe_add_kernel,
        out_shape=out_shape,
        grid_spec=pltpu.PrefetchScalarGridSpec(
            num_scalar_prefetch=0,
            grid=grid,
            in_specs=in_specs,
            out_specs=out_spec,
        ),
        compiler_params=pltpu.CompilerParams(
            dimension_semantics=("parallel",),
            vmem_limit_bytes=32 * 1024 * 1024,
        ),
        cost_estimate=pl.CostEstimate(
            flops=R * C,
            transcendentals=0,
            bytes_accessed=8 * R * C + 4 * C,
        ),
        # In-place add on x's buffer when x is donated/dead at the call site.
        input_output_aliases={0: 0},
    )(x_in, pe_in)

    # TODO(synk): training-mode dropout (p > 0) not implemented in-kernel; at
    # inference / p=0 dropout is an identity, matching this forward pass.
    return out.reshape(B, N, T, F)


def _reference(x, pe, lookup_index=None):
    T = x.shape[2]
    if lookup_index is not None:
        pe_sel = pe[jnp.asarray(lookup_index)]
    else:
        pe_sel = pe[:T]
    return x + pe_sel[None, None, :, :]


if __name__ == "__main__":
    B, N, T, d_model, max_len = 2, 16, 8, 32, 16

    key = jax.random.PRNGKey(0)
    x = jax.random.normal(key, (B, N, T, d_model), dtype=jnp.float32)

    pe = build_temporal_pe(max_len, d_model)

    # Default (sequential) lookup path.
    out = temporal_positional_encoding(x, pe, force_pallas=True)
    out = jax.block_until_ready(out)
    ref = _reference(x, pe)
    assert out.shape == (B, N, T, d_model)
    assert jnp.allclose(out, ref, atol=1e-6, rtol=1e-6)

    # Explicit lookup_index path (same kernel / shapes, so compile is reused).
    lookup = np.arange(T)[::-1].copy()
    out_l = temporal_positional_encoding(x, pe, lookup_index=lookup,
                                         force_pallas=True)
    out_l = jax.block_until_ready(out_l)
    ref_l = _reference(x, pe, lookup_index=lookup)
    assert jnp.allclose(out_l, ref_l, atol=1e-6, rtol=1e-6)

    print("KERNEL_OK")
</pallas_src>

<mosaic_0001>
module attributes {stable_mosaic.version = 11 : i64} {
  func.func @_pe_add_kernel(%arg0: i32, %arg1: memref<16x256xf32, #tpu.memory_space<vmem>>, %arg2: memref<1x256xf32, #tpu.memory_space<vmem>>, %arg3: memref<16x256xf32, #tpu.memory_space<vmem>>) attributes {dimension_semantics = [#tpu.dimension_semantics<parallel>], iteration_bounds = array<i64: 2>, scalar_prefetch = 0 : i64, scratch_operands = 0 : i64, tpu.core_type = #tpu.core_type<tc>, window_params = [{transform_indices = @transform_0, window_bounds = array<i64: 16, 256>}, {pipeline_mode = #tpu.pipeline_mode<synchronous>, transform_indices = @transform_1, window_bounds = array<i64: 1, 256>}, {transform_indices = @transform_2, window_bounds = array<i64: 16, 256>}]} {
    %c0 = arith.constant 0 : index
    %c0_0 = arith.constant 0 : index
    %0 = vector.load %arg1[%c0, %c0_0] : memref<16x256xf32, #tpu.memory_space<vmem>>, vector<16x256xf32>
    %c0_1 = arith.constant 0 : index
    %c0_2 = arith.constant 0 : index
    %1 = vector.load %arg2[%c0_1, %c0_2] : memref<1x256xf32, #tpu.memory_space<vmem>>, vector<1x256xf32>
    %2 = vector.broadcast %1 : vector<1x256xf32> to vector<16x256xf32>
    %3 = arith.addf %0, %2 : vector<16x256xf32>
    %c0_3 = arith.constant 0 : index
    %c0_4 = arith.constant 0 : index
    %4 = vector.load %arg3[%c0_3, %c0_4] : memref<16x256xf32, #tpu.memory_space<vmem>>, vector<16x256xf32>
    tpu.vector_store %arg3[%c0_3, %c0_4], %3 {strides = array<i32>} : memref<16x256xf32, #tpu.memory_space<vmem>>, vector<16x256xf32>,
    return
  }
  func.func @transform_0(%arg0: i32) -> (i32, i32) {
    %c0_i32 = arith.constant 0 : i32
    %c0_i32_0 = arith.constant 0 : i32
    return %arg0, %c0_i32 : i32, i32
  }
  func.func @transform_1(%arg0: i32) -> (i32, i32) {
    %c0_i32 = arith.constant 0 : i32
    %c0_i32_0 = arith.constant 0 : i32
    %c0_i32_1 = arith.constant 0 : i32
    return %c0_i32, %c0_i32_0 : i32, i32
  }
  func.func @transform_2(%arg0: i32) -> (i32, i32) {
    %c0_i32 = arith.constant 0 : i32
    %c0_i32_0 = arith.constant 0 : i32
    return %arg0, %c0_i32 : i32, i32
  }
}

</mosaic_0001>

<llo_original>
// kernel: tpu_custom_call.1
$region0: #{tpu_custom_call.1}
  #allocation0 [shape = 'u32[]', space=smem, size = 0x4, offset = 0x4, fixed_abs, tag = 'smem constant byte address 0x4 - core index']
  #allocation1 [shape = 'u32[72,128]{1,0:T(1,128)}', space=vmem, size = 0x9000, scoped, tag = 'internal scratch']
  %s0 = inlined_call_operand.hbm [shape: f32[32,256], index: 0, kind: input, shape index: {}, may-alias: {0,2}]
  %s1 = inlined_call_operand.vmem [shape: f32[1,256], index: 1, kind: input, shape index: {}]
  %s2 = inlined_call_operand.hbm [shape: f32[32,256], index: 2, kind: output, shape index: {}, may-alias: {0,2}]
  %s3 = sld [smem:[#allocation0]]
  $region45: #{tpu_custom_call.1} parent=0
    _
  %s5 = ssub.s32 1, %s3
  %s6 = scalar_select 0, %s5, %s3
  $region1: #{tpu_custom_call.1} parent=0
    #allocation2 [shape = 'u8[32768]{0}', space=vmem, size = 0x8000, scoped, tag = 'input window, operand 0']
    #allocation3 [shape = 's32[2]{0}', space=sflag, size = 0x8, scoped, tag = 'scoped memory for tpu_custom_call.1']
    #allocation4 [shape = 's32[2]{0}', space=sflag, size = 0x8, scoped, tag = 'scoped memory for tpu_custom_call.1']
    #allocation5 [shape = 'u8[32768]{0}', space=vmem, size = 0x8000, scoped, tag = 'output window, operand 0']
    %7 = vsyncpa [#allocation3], 0
    %s8 = scalar_lea.sflag [#allocation3], 1
    %9 = vsyncpa %s8, 0
    %10 = vsyncpa [#allocation4], 0
    %s11 = scalar_lea.sflag [#allocation4], 1
    %12 = vsyncpa %s11, 0
    loop: start=0, step=1, limit=4
    $region2: #{tpu_custom_call.1} parent=1 // loop_pre_header
      _
    $region3: #{tpu_custom_call.1} parent=1 // loop_header
      %s14 = sphi 0, %s18
      %p15 = scmp.ge.s32.totalorder %s14, 4
      %s24 = sphi 0, %s26
      %s27 = sphi 0, %s24
      %s28 = sphi 0, %s27
      %s44 = sphi 0, %s28
      %s48 = sphi 0, %s48
      %s50 = sphi 0, %s48
      %s51 = sphi 0, %s50
      %s65 = sphi 0, %s51
      %s71 = sphi 0, %s73
      %s74 = sphi 0, %s71
      %s75 = sphi 0, %s74
      %s91 = sphi 0, %s75
    $region4: #{tpu_custom_call.1} parent=1 // loop_header_branch
      %17 = sbr.rel (%p15) target = $region8
    $region5: #{tpu_custom_call.1} parent=1 // loop_body
      %s19 = ssub.s32 %s14, 1
      %s20 = ssub.s32 %s14, 2
      %s21 = sadd.s32 %s14, 1
      %s22 = ssub.s32 %s14, %s21
      %p23 = scmp.eq.s32.totalorder %s22, 0
      %s25 = sadd.s32 %s24, 1
      %s26 = scalar_select %p23, %s24, %s25
      %p29 = pneg %p23
      %p30 = scmp.eq.s32.totalorder %s14, 1
      %p31 = por %p29, %p30
      %p32 = scmp.ne.s32.totalorder %s24, %s27
      %p33 = scmp.eq.s32.totalorder %s14, 0
      %p34 = por %p32, %p33
      %p35 = scmp.ne.s32.totalorder %s24, %s27
      %p36 = scmp.eq.s32.totalorder %s19, 1
      %p37 = por %p35, %p36
      %p38 = scmp.ne.s32.totalorder %s27, %s28
      %p39 = scmp.eq.s32.totalorder %s19, 0
      %p40 = por %p38, %p39
      %p41 = scmp.ne.s32.totalorder %s27, %s28
      %p42 = scmp.eq.s32.totalorder %s20, 1
      %p43 = por %p41, %p42
      %p45 = scmp.ne.s32.totalorder %s28, %s44
      %p46 = scmp.eq.s32.totalorder %s20, 0
      %p47 = por %p45, %p46
      %s49 = sadd.s32 %s48, 1
      %p52 = scmp.eq.s32.totalorder %s14, 1
      %p53 = scmp.ne.s32.totalorder %s48, %s50
      %p54 = scmp.eq.s32.totalorder %s14, 0
      %p55 = por %p53, %p54
      %p56 = scmp.ne.s32.totalorder %s48, %s50
      %p57 = scmp.eq.s32.totalorder %s19, 1
      %p58 = por %p56, %p57
      %p59 = scmp.ne.s32.totalorder %s50, %s51
      %p60 = scmp.eq.s32.totalorder %s19, 0
      %p61 = por %p59, %p60
      %p62 = scmp.ne.s32.totalorder %s50, %s51
      %p63 = scmp.eq.s32.totalorder %s20, 1
      %p64 = por %p62, %p63
      %p66 = scmp.ne.s32.totalorder %s51, %s65
      %p67 = scmp.eq.s32.totalorder %s20, 0
      %p68 = por %p66, %p67
      %s69 = ssub.s32 %s14, %s21
      %p70 = scmp.eq.s32.totalorder %s69, 0
      %s72 = sadd.s32 %s71, 1
      %s73 = scalar_select %p70, %s71, %s72
      %p76 = pneg %p70
      %p77 = scmp.eq.s32.totalorder %s14, 1
      %p78 = por %p76, %p77
      %p79 = scmp.ne.s32.totalorder %s71, %s74
      %p80 = scmp.eq.s32.totalorder %s14, 0
      %p81 = por %p79, %p80
      %p82 = scmp.ne.s32.totalorder %s71, %s74
      %p83 = scmp.eq.s32.totalorder %s19, 1
      %p84 = por %p82, %p83
      %p85 = scmp.ne.s32.totalorder %s74, %s75
      %p86 = scmp.eq.s32.totalorder %s19, 0
      %p87 = por %p85, %p86
      %p88 = scmp.ne.s32.totalorder %s74, %s75
      %p89 = scmp.eq.s32.totalorder %s20, 1
      %p90 = por %p88, %p89
      %p92 = scmp.ne.s32.totalorder %s75, %s91
      %p93 = scmp.eq.s32.totalorder %s20, 0
      %p94 = por %p92, %p93
      %p95 = scmp.le.s32.totalorder 1, %s14
      %p96 = scmp.lt.s32.totalorder %s14, 3
      %p97 = pnand %p95, %p96
      %p98 = pneg %p97
      // Predicated region
      $region9: #{tpu_custom_call.1} parent=5 // pred_check
        _
      $region10: #{tpu_custom_call.1} parent=5 // pred_check_branch
        %100 = sbr.rel (%p97) target = $region12
      $region11: #{tpu_custom_call.1} parent=5 // pred_region
        %s101 = ssub.s32 %s14, 1
        // Predicated region
        $region13: #{tpu_custom_call.1} parent=11 // pred_check
          %p102 = pneg %p61
        $region14: #{tpu_custom_call.1} parent=11 // pred_check_branch
          %104 = sbr.rel (%p102) target = $region16
        $region15: #{tpu_custom_call.1} parent=11 // pred_region
          _
        $region16: #{tpu_custom_call.1} parent=11 // pred_fallthru
          _
      $region12: #{tpu_custom_call.1} parent=5 // pred_fallthru
        _
      %p105 = scmp.lt.s32.totalorder %s14, 2
      // Predicated region
      $region17: #{tpu_custom_call.1} parent=5 // pred_check
        %p106 = pneg %p105
      $region18: #{tpu_custom_call.1} parent=5 // pred_check_branch
        %108 = sbr.rel (%p106) target = $region20
      $region19: #{tpu_custom_call.1} parent=5 // pred_region
        // Predicated region
        $region21: #{tpu_custom_call.1} parent=19 // pred_check
          %p109 = pneg %p34
        $region22: #{tpu_custom_call.1} parent=19 // pred_check_branch
          %111 = sbr.rel (%p109) target = $region24
        $region23: #{tpu_custom_call.1} parent=19 // pred_region
          %s112 = sand.u32 %s24, 1
          %s113 = scalar_lea.sflag [#allocation3], %s112
          %s114 = sand.u32 %s24, 1
          %s115 = smul.addr %s114, 32
          %s116 = scalar_lea.vmem [#allocation2], %s115
          %s117 = smul.u32 2, %s14
          %119 = vsyncadd %s113, 0
          %s120 = smul.addr %s117, 2
          %s121 = smul.addr %s120, 8
          %s122 = scalar_lea.hbm %s0, %s121
          %s123 = sshll.u32 %s122, 4
          %s124 = int_to_ptr.hbm [resolvable:$true] %s123
          %s125 = sshll.u32 %s116, 4
          %s126 = int_to_ptr.vmem [resolvable:$true] %s125
          %131 = dma.hbm_to_vmem [thread:$0]  %s124, 512, %s126, %s113, 256, 256, 16
        $region24: #{tpu_custom_call.1} parent=19 // pred_fallthru
          _
      $region20: #{tpu_custom_call.1} parent=5 // pred_fallthru
        _
      %p132 = scmp.le.s32.totalorder 1, %s14
      %p133 = scmp.lt.s32.totalorder %s14, 3
      %p134 = pnand %p132, %p133
      %p135 = pneg %p134
      // Predicated region
      $region25: #{tpu_custom_call.1} parent=5 // pred_check
        _
      $region26: #{tpu_custom_call.1} parent=5 // pred_check_branch
        %137 = sbr.rel (%p134) target = $region28
      $region27: #{tpu_custom_call.1} parent=5 // pred_region
        %s138 = ssub.s32 %s14, 1
        %s139 = sand.u32 %s27, 1
        %s140 = scalar_lea.sflag [#allocation3], %s139
        %s141 = sand.u32 %s27, 1
        %s142 = smul.addr %s141, 32
        %s143 = scalar_lea.vmem [#allocation2], %s142
        // Predicated region
        $region29: #{tpu_custom_call.1} parent=27 // pred_check
          %p144 = pneg %p40
        $region30: #{tpu_custom_call.1} parent=27 // pred_check_branch
          %146 = sbr.rel (%p144) target = $region32
        $region31: #{tpu_custom_call.1} parent=27 // pred_region
          %148 = dma.done %s140, 512
        $region32: #{tpu_custom_call.1} parent=27 // pred_fallthru
          _
        %s149 = sand.u32 %s27, 1
        %s150 = scalar_lea.sflag [#allocation3], %s149
        %s151 = sand.u32 %s27, 1
        %s152 = smul.addr %s151, 32
        %s153 = scalar_lea.vmem [#allocation2], %s152
        %p154 = pneg %p40
        %p155 = pneg %p37
        %p156 = pneg %p61
        %p157 = pneg %p58
        %p158 = pneg %p87
        %p159 = pneg %p84
        %s160 = sand.u32 %s74, 1
        %s161 = scalar_lea.sflag [#allocation4], %s160
        %s162 = sand.u32 %s74, 1
        %s163 = smul.addr %s162, 32
        %s164 = scalar_lea.vmem [#allocation5], %s163
        %s165 = smul.u32 2, %s19
        %s166 = smul.u32 2, %s19
        %v167 = vld [vmem:[%s143] sm:$0xff]
        %v168 = vld [vmem:[%s143 + $0x8] sm:$0xff]
        %v169 = vld [vmem:[%s143 + $0x10] sm:$0xff]
        %v170 = vld [vmem:[%s143 + $0x18] sm:$0xff]
        %v171 = vld [vmem:[%s1] sm:$0x3]
        %v173 = vperm.slane %v171, 0
        %v174 = vperm.slane %v171, 1
        %v177 = vadd.f32 %v167, %v173
        %v178 = vadd.f32 %v168, %v174
        %v179 = vadd.f32 %v169, %v173
        %v180 = vadd.f32 %v170, %v174
        %181 = vst [vmem:[%s164] sm:$0xff] %v177
        %182 = vst [vmem:[%s164 + $0x8] sm:$0xff] %v178
        %183 = vst [vmem:[%s164 + $0x10] sm:$0xff] %v179
        %184 = vst [vmem:[%s164 + $0x18] sm:$0xff] %v180
        %s185 = sand.u32 %s74, 1
        %s186 = scalar_lea.sflag [#allocation4], %s185
        %s187 = sand.u32 %s74, 1
        %s188 = smul.addr %s187, 32
        %s189 = scalar_lea.vmem [#allocation5], %s188
        // Predicated region
        $region33: #{tpu_custom_call.1} parent=27 // pred_check
          %p190 = pneg %p84
        $region34: #{tpu_custom_call.1} parent=27 // pred_check_branch
          %192 = sbr.rel (%p190) target = $region36
        $region35: #{tpu_custom_call.1} parent=27 // pred_region
          %s193 = smul.u32 2, %s19
          %195 = vsyncadd %s186, 0
          %s196 = smul.addr %s193, 2
          %s197 = smul.addr %s196, 8
          %s198 = scalar_lea.hbm %s2, %s197
          %s199 = sshll.u32 %s189, 4
          %s200 = int_to_ptr.vmem [resolvable:$true] %s199
          %s201 = sshll.u32 %s198, 4
          %s202 = int_to_ptr.hbm [resolvable:$true] %s201
          %207 = dma.vmem_to_hbm [thread:$0]  %s200, 512, %s202, %s186, 256, 256, 16
        $region36: #{tpu_custom_call.1} parent=27 // pred_fallthru
          _
      $region28: #{tpu_custom_call.1} parent=5 // pred_fallthru
        _
      %p208 = scmp.le.s32.totalorder 2, %s14
      // Predicated region
      $region37: #{tpu_custom_call.1} parent=5 // pred_check
        %p209 = pneg %p208
      $region38: #{tpu_custom_call.1} parent=5 // pred_check_branch
        %211 = sbr.rel (%p209) target = $region40
      $region39: #{tpu_custom_call.1} parent=5 // pred_region
        %s212 = ssub.s32 %s14, 2
        // Predicated region
        $region41: #{tpu_custom_call.1} parent=39 // pred_check
          %p213 = pneg %p90
        $region42: #{tpu_custom_call.1} parent=39 // pred_check_branch
          %215 = sbr.rel (%p213) target = $region44
        $region43: #{tpu_custom_call.1} parent=39 // pred_region
          %s216 = sand.u32 %s75, 1
          %s217 = scalar_lea.sflag [#allocation4], %s216
          %s218 = sand.u32 %s75, 1
          %s219 = smul.addr %s218, 32
          %s220 = scalar_lea.vmem [#allocation5], %s219
          %222 = dma.done %s217, 512
        $region44: #{tpu_custom_call.1} parent=39 // pred_fallthru
          _
      $region40: #{tpu_custom_call.1} parent=5 // pred_fallthru
        _
    $region6: #{tpu_custom_call.1} parent=1 // loop_footer
      %s18 = sadd.s32 1, %s14
    $region7: #{tpu_custom_call.1} parent=1 // loop_footer_branch
      %13 = sbr.rel target = $region3
    $region8: #{tpu_custom_call.1} parent=1 // loop_exit
      _
    %223 = vsyncpa [#allocation3], 1
    %s224 = scalar_lea.sflag [#allocation3], 1
    %225 = vsyncpa %s224, 1
    %226 = vsyncpa [#allocation4], 1
    %s227 = scalar_lea.sflag [#allocation4], 1
    %228 = vsyncpa %s227, 1

</llo_original>
